<compile_context>
chip_gen: v6e
topology: v6e:2x2x1
jax: 0.10.0
libtpu: 0.0.40
codegen_flags: <defaults>
</compile_context>

<pallas_src>
import functools

import jax
import jax.numpy as jnp
from jax.experimental import pallas as pl
from jax.experimental.pallas import tpu as pltpu


def _convlstm_kernel(patch_ref, w_ref, c_ref, h_out_ref, c_out_ref, *, C_hid):
    """One grid step: Bb batch elements folded into the lane dim.

    patch_ref : (Kp, Lb)       im2col patch (+ ones row for bias), zero-padded
                               to Kp = multiple of 128; Lb = Bb * H * W lanes
    w_ref     : (4*C_hid, Kp)  conv weights (+ bias column), zero-padded
    c_ref     : (C_hid, Lb)    previous cell state
    h_out_ref : (C_hid, Lb)    new hidden state
    c_out_ref : (C_hid, Lb)    new cell state
    """
    # Single fused MXU matmul; the bias is the ones-row x bias-column product,
    # so no separate broadcast add is needed.  Accumulation is f32.
    cc = jnp.dot(w_ref[...], patch_ref[...],
                 preferred_element_type=jnp.float32)

    # Gate slices are clean sublane slices when C_hid % 8 == 0 (f32 acc);
    # still correct otherwise, just with extra relayout copies.
    i = jax.nn.sigmoid(cc[0 * C_hid:1 * C_hid])
    f = jax.nn.sigmoid(cc[1 * C_hid:2 * C_hid])
    o = jax.nn.sigmoid(cc[2 * C_hid:3 * C_hid])
    g = jnp.tanh(cc[3 * C_hid:4 * C_hid])

    c_prev = c_ref[...].astype(jnp.float32)
    c_new = f * c_prev + i * g
    h_new = o * jnp.tanh(c_new)

    h_out_ref[...] = h_new.astype(h_out_ref.dtype)
    c_out_ref[...] = c_new.astype(c_out_ref.dtype)


def _pick_batch_block(B, M, max_lanes_per_step=2048):
    """How many batch elements to fold into the lanes of one grid step.

    Keeps the grid extent >= 2 whenever B >= 2 so the "parallel" grid axis can
    be split across v7x's two TensorCores, while making each step as
    lane-dense as possible (amortizes per-step overhead / weight staging on
    all generations).
    """
    if B == 1 or M % 128 != 0:
        # Single full-extent block sidesteps the 128-lane divisibility rule.
        return B
    best = 1
    for bb in range(1, B // 2 + 1):          # guarantees B // bb >= 2 steps
        if B % bb == 0 and bb * M <= max_lanes_per_step:
            best = bb
    return best


@functools.partial(jax.jit,
                   static_argnames=("kernel_size", "matmul_dtype",
                                    "batch_block"))
def conv_lstm_cell(x, hidden, cell, weight, bias, *, kernel_size,
                   matmul_dtype=jnp.bfloat16, batch_block=None):
    """ConvLSTMCell.forward (matches the PyTorch module).

    x      : (B, C_in, H, W)
    hidden : (B, C_hid, H, W)
    cell   : (B, C_hid, H, W)
    weight : (4*C_hid, C_in + C_hid, KH, KW)   PyTorch Conv2d layout
    bias   : (4*C_hid,) or None
    Returns (hidden, cell) in NCHW.
    """
    if isinstance(kernel_size, int):
        kernel_size = (kernel_size, kernel_size)
    KH, KW = kernel_size
    ph, pw = KH // 2, KW // 2
    B, C_in, H, W = x.shape
    C_hid = hidden.shape[1]
    C_tot = C_in + C_hid
    K = KH * KW * C_tot
    M = H * W
    # +1 for the bias ones-row, then pad the contraction to full 128-deep MXU
    # passes (no sublane remainder, no separate bias add).
    Kp = pl.cdiv(K + 1, 128) * 128

    Bb = batch_block if batch_block is not None else _pick_batch_block(B, M)
    assert B % Bb == 0, (B, Bb)
    Lb = Bb * M
    out_dtype = x.dtype

    if bias is None:
        bias = jnp.zeros((4 * C_hid,), weight.dtype)

    # ---- wrapper glue (all fused under the enclosing jit) ----
    # Channel-major, batch folded into lanes: lane index = b * M + m.
    combined = jnp.concatenate([x, hidden], axis=1)               # (B, C_tot, H, W)
    combined = jnp.transpose(combined, (1, 0, 2, 3))              # (C_tot, B, H, W)
    combined_p = jnp.pad(combined, ((0, 0), (0, 0), (ph, ph), (pw, pw)))
    taps = [combined_p[:, :, kh:kh + H, kw:kw + W]
            for kh in range(KH) for kw in range(KW)]              # (C_tot, B, H, W) each
    patch = jnp.stack(taps, axis=0).reshape(K, B * M)             # rows ordered (kh, kw, c)
    patch = jnp.concatenate(
        [patch,
         jnp.ones((1, B * M), patch.dtype),                       # bias row
         jnp.zeros((Kp - K - 1, B * M), patch.dtype)], axis=0)    # pad to Kp

    # PyTorch weight (O, I, KH, KW) -> (O, KH, KW, I) -> (O, K); same K order.
    w2 = jnp.transpose(weight, (0, 2, 3, 1)).reshape(4 * C_hid, K)
    w2 = jnp.concatenate(
        [w2,
         bias.reshape(4 * C_hid, 1).astype(w2.dtype),             # bias column
         jnp.zeros((4 * C_hid, Kp - K - 1), w2.dtype)], axis=1)

    # bf16 operands halve patch DMA/VMEM and hit the fast MXU path on v6e/v7x;
    # accumulation and all gate math remain f32 inside the kernel.
    patch = patch.astype(matmul_dtype)
    w2 = w2.astype(matmul_dtype)

    cell_flat = jnp.transpose(cell.reshape(B, C_hid, M),
                              (1, 0, 2)).reshape(C_hid, B * M)

    kernel = functools.partial(_convlstm_kernel, C_hid=C_hid)

    h_flat, c_flat = pl.pallas_call(
        kernel,
        out_shape=(jax.ShapeDtypeStruct((C_hid, B * M), out_dtype),
                   jax.ShapeDtypeStruct((C_hid, B * M), out_dtype)),
        grid_spec=pltpu.PrefetchScalarGridSpec(
            num_scalar_prefetch=0,
            grid=(B // Bb,),
            in_specs=[
                pl.BlockSpec((Kp, Lb), lambda i: (0, i)),
                # Constant index map: the ~16 KB weight tile is revisited, not
                # re-fetched per step; not worth pl.Buffered(1) at this size.
                pl.BlockSpec((4 * C_hid, Kp), lambda i: (0, 0)),
                pl.BlockSpec((C_hid, Lb), lambda i: (0, i)),
            ],
            out_specs=[
                pl.BlockSpec((C_hid, Lb), lambda i: (0, i)),
                pl.BlockSpec((C_hid, Lb), lambda i: (0, i)),
            ],
        ),
        compiler_params=pltpu.CompilerParams(
            dimension_semantics=("parallel",)),
    )(patch, w2, cell_flat)

    def _unflatten(a):  # (C_hid, B*M) -> (B, C_hid, H, W), fused under jit
        return jnp.transpose(a.reshape(C_hid, B, H, W), (1, 0, 2, 3))

    return _unflatten(h_flat), _unflatten(c_flat)


def _reference(x, h, c, weight, bias, kernel_size):
    """Pure-JAX reference (NCHW) for correctness checking."""
    KH, KW = kernel_size
    combined = jnp.concatenate([x, h], axis=1)
    cc = jax.lax.conv_general_dilated(
        combined, weight, window_strides=(1, 1),
        padding=((KH // 2, KH // 2), (KW // 2, KW // 2)),
        dimension_numbers=("NCHW", "OIHW", "NCHW"))
    cc = cc + bias[None, :, None, None]
    cc_i, cc_f, cc_o, cc_g = jnp.split(cc, 4, axis=1)
    i = jax.nn.sigmoid(cc_i)
    f = jax.nn.sigmoid(cc_f)
    o = jax.nn.sigmoid(cc_o)
    g = jnp.tanh(cc_g)
    cell = f * c + i * g
    hidden = o * jnp.tanh(cell)
    return hidden, cell


if __name__ == "__main__":
    # Small deterministic setup: batch=2, input_channels=4, hidden_channels=8,
    # spatial 16x16, kernel_size=3.
    B, C_in, C_hid, H, W = 2, 4, 8, 16, 16
    kernel_size = (3, 3)
    KH, KW = kernel_size

    key = jax.random.PRNGKey(0)
    kx, khid, kcell, kw_, kb = jax.random.split(key, 5)

    x = jax.random.normal(kx, (B, C_in, H, W), jnp.float32)
    hidden0 = jax.random.normal(khid, (B, C_hid, H, W), jnp.float32)
    cell0 = jax.random.normal(kcell, (B, C_hid, H, W), jnp.float32)

    # Conv2d(in=C_in+C_hid, out=4*C_hid, k=3, padding=1, bias=True) params.
    fan_in = (C_in + C_hid) * KH * KW
    bound = 1.0 / (fan_in ** 0.5)
    weight = jax.random.uniform(kw_, (4 * C_hid, C_in + C_hid, KH, KW),
                                jnp.float32, minval=-bound, maxval=bound)
    bias = jax.random.uniform(kb, (4 * C_hid,), jnp.float32,
                              minval=-bound, maxval=bound)

    h_ref, c_ref = _reference(x, hidden0, cell0, weight, bias, kernel_size)

    # Exact path (f32 MXU operands): tight tolerance.
    h_out, c_out = conv_lstm_cell(x, hidden0, cell0, weight, bias,
                                  kernel_size=kernel_size,
                                  matmul_dtype=jnp.float32)
    jax.block_until_ready((h_out, c_out))
    assert jnp.allclose(h_out, h_ref, atol=1e-5, rtol=1e-5)
    assert jnp.allclose(c_out, c_ref, atol=1e-5, rtol=1e-5)

    # Default fast path (bf16 MXU operands, f32 accumulation & gate math).
    h_bf, c_bf = conv_lstm_cell(x, hidden0, cell0, weight, bias,
                                kernel_size=kernel_size)
    jax.block_until_ready((h_bf, c_bf))
    assert jnp.allclose(h_bf, h_ref, atol=5e-2, rtol=5e-2)
    assert jnp.allclose(c_bf, c_ref, atol=5e-2, rtol=5e-2)

    print("KERNEL_OK")
</pallas_src>

<mosaic_0001>
module attributes {stable_mosaic.version = 11 : i64} {
  func.func @_convlstm_kernel(%arg0: i32, %arg1: memref<128x256xf32, #tpu.memory_space<vmem>>, %arg2: memref<32x128xf32, #tpu.memory_space<vmem>>, %arg3: memref<8x256xf32, #tpu.memory_space<vmem>>, %arg4: memref<8x256xf32, #tpu.memory_space<vmem>>, %arg5: memref<8x256xf32, #tpu.memory_space<vmem>>) attributes {dimension_semantics = [#tpu.dimension_semantics<parallel>], iteration_bounds = array<i64: 2>, scalar_prefetch = 0 : i64, scratch_operands = 0 : i64, tpu.core_type = #tpu.core_type<tc>, window_params = [{transform_indices = @transform_0, window_bounds = array<i64: 128, 256>}, {pipeline_mode = #tpu.pipeline_mode<synchronous>, transform_indices = @transform_1, window_bounds = array<i64: 32, 128>}, {transform_indices = @transform_2, window_bounds = array<i64: 8, 256>}, {transform_indices = @transform_3, window_bounds = array<i64: 8, 256>}, {transform_indices = @transform_4, window_bounds = array<i64: 8, 256>}]} {
    %c0 = arith.constant 0 : index
    %c0_0 = arith.constant 0 : index
    %0 = vector.load %arg2[%c0, %c0_0] : memref<32x128xf32, #tpu.memory_space<vmem>>, vector<32x128xf32>
    %c0_1 = arith.constant 0 : index
    %c0_2 = arith.constant 0 : index
    %1 = vector.load %arg1[%c0_1, %c0_2] : memref<128x256xf32, #tpu.memory_space<vmem>>, vector<128x256xf32>
    %cst = arith.constant dense<0.000000e+00> : vector<32x256xf32>
    %2 = tpu.matmul %0, %1, %cst {dimension_numbers = #tpu.dot_dimension_numbers<[1], [0], [0], [1], [0, 0, 1, 1], [], []>} : vector<32x128xf32>, vector<128x256xf32>, vector<32x256xf32> -> vector<32x256xf32>
    %3 = vector.extract_strided_slice %2 {offsets = [0, 0], sizes = [8, 256], strides = [1, 1]} : vector<32x256xf32> to vector<8x256xf32>
    %4 = arith.negf %3 : vector<8x256xf32>
    %5 = math.exp %4 : vector<8x256xf32>
    %cst_3 = arith.constant 1.000000e+00 : f32
    %6 = vector.broadcast %cst_3 : f32 to vector<8x256xf32>
    %7 = arith.addf %6, %5 : vector<8x256xf32>
    %8 = arith.divf %6, %7 : vector<8x256xf32>
    %9 = vector.extract_strided_slice %2 {offsets = [8, 0], sizes = [8, 256], strides = [1, 1]} : vector<32x256xf32> to vector<8x256xf32>
    %10 = arith.negf %9 : vector<8x256xf32>
    %11 = math.exp %10 : vector<8x256xf32>
    %cst_4 = arith.constant 1.000000e+00 : f32
    %12 = vector.broadcast %cst_4 : f32 to vector<8x256xf32>
    %13 = arith.addf %12, %11 : vector<8x256xf32>
    %14 = arith.divf %12, %13 : vector<8x256xf32>
    %15 = vector.extract_strided_slice %2 {offsets = [16, 0], sizes = [8, 256], strides = [1, 1]} : vector<32x256xf32> to vector<8x256xf32>
    %16 = arith.negf %15 : vector<8x256xf32>
    %17 = math.exp %16 : vector<8x256xf32>
    %cst_5 = arith.constant 1.000000e+00 : f32
    %18 = vector.broadcast %cst_5 : f32 to vector<8x256xf32>
    %19 = arith.addf %18, %17 : vector<8x256xf32>
    %20 = arith.divf %18, %19 : vector<8x256xf32>
    %21 = vector.extract_strided_slice %2 {offsets = [24, 0], sizes = [8, 256], strides = [1, 1]} : vector<32x256xf32> to vector<8x256xf32>
    %22 = math.tanh %21 : vector<8x256xf32>
    %c0_6 = arith.constant 0 : index
    %c0_7 = arith.constant 0 : index
    %23 = vector.load %arg3[%c0_6, %c0_7] : memref<8x256xf32, #tpu.memory_space<vmem>>, vector<8x256xf32>
    %24 = arith.mulf %14, %23 : vector<8x256xf32>
    %25 = arith.mulf %8, %22 : vector<8x256xf32>
    %26 = arith.addf %24, %25 : vector<8x256xf32>
    %27 = math.tanh %26 : vector<8x256xf32>
    %28 = arith.mulf %20, %27 : vector<8x256xf32>
    %c0_8 = arith.constant 0 : index
    %c0_9 = arith.constant 0 : index
    %29 = vector.load %arg4[%c0_8, %c0_9] : memref<8x256xf32, #tpu.memory_space<vmem>>, vector<8x256xf32>
    tpu.vector_store %arg4[%c0_8, %c0_9], %28 {strides = array<i32>} : memref<8x256xf32, #tpu.memory_space<vmem>>, vector<8x256xf32>,
    %c0_10 = arith.constant 0 : index
    %c0_11 = arith.constant 0 : index
    %30 = vector.load %arg5[%c0_10, %c0_11] : memref<8x256xf32, #tpu.memory_space<vmem>>, vector<8x256xf32>
    tpu.vector_store %arg5[%c0_10, %c0_11], %26 {strides = array<i32>} : memref<8x256xf32, #tpu.memory_space<vmem>>, vector<8x256xf32>,
    return
  }
  func.func @transform_0(%arg0: i32) -> (i32, i32) {
    %c0_i32 = arith.constant 0 : i32
    %c0_i32_0 = arith.constant 0 : i32
    return %c0_i32, %arg0 : i32, i32
  }
  func.func @transform_1(%arg0: i32) -> (i32, i32) {
    %c0_i32 = arith.constant 0 : i32
    %c0_i32_0 = arith.constant 0 : i32
    %c0_i32_1 = arith.constant 0 : i32
    return %c0_i32, %c0_i32_0 : i32, i32
  }
  func.func @transform_2(%arg0: i32) -> (i32, i32) {
    %c0_i32 = arith.constant 0 : i32
    %c0_i32_0 = arith.constant 0 : i32
    return %c0_i32, %arg0 : i32, i32
  }
  func.func @transform_3(%arg0: i32) -> (i32, i32) {
    %c0_i32 = arith.constant 0 : i32
    %c0_i32_0 = arith.constant 0 : i32
    return %c0_i32, %arg0 : i32, i32
  }
  func.func @transform_4(%arg0: i32) -> (i32, i32) {
    %c0_i32 = arith.constant 0 : i32
    %c0_i32_0 = arith.constant 0 : i32
    return %c0_i32, %arg0 : i32, i32
  }
}

</mosaic_0001>

<llo_original>
// kernel: conv_lstm_cell.1
$region0: #{conv_lstm_cell.1}
  #allocation0 [shape = 'u32[]', space=smem, size = 0x4, offset = 0x4, fixed_abs, tag = 'smem constant byte address 0x4 - core index']
  #allocation1 [shape = 'u32[144,128]{1,0:T(1,128)}', space=vmem, size = 0x12000, scoped, tag = 'internal scratch']
  %s0 = inlined_call_operand.vmem [shape: f32[128,512], index: 0, kind: input, shape index: {}]
  %s1 = inlined_call_operand.vmem [shape: f32[32,128], index: 1, kind: input, shape index: {}]
  %s2 = inlined_call_operand.vmem [shape: f32[8,512], index: 2, kind: input, shape index: {}]
  %s3 = inlined_call_operand.vmem [shape: f32[8,512], index: 3, kind: output, shape index: {0}]
  %s4 = inlined_call_operand.vmem [shape: f32[8,512], index: 4, kind: output, shape index: {1}]
  %5 = xla_tuple %s3, %s4
  %s6 = sld [smem:[#allocation0]]
  $region76: #{conv_lstm_cell.1} parent=0
    _
  %s8 = ssub.s32 1, %s6
  %s9 = scalar_select 0, %s8, %s6
  $region1: #{conv_lstm_cell.1} parent=0
    #allocation2 [shape = 'u8[262144]{0}', space=vmem, size = 0x40000, scoped, tag = 'input window, operand 0']
    loop: start=0, step=1, limit=4
    $region2: #{conv_lstm_cell.1} parent=1 // loop_pre_header
      _
    $region3: #{conv_lstm_cell.1} parent=1 // loop_header
      %s11 = sphi 0, %s15
      %p12 = scmp.ge.s32.totalorder %s11, 4
      %s21 = sphi 0, %s23
      %s24 = sphi 0, %s21
      %s25 = sphi 0, %s24
      %s41 = sphi 0, %s25
      %s45 = sphi 0, %s45
      %s47 = sphi 0, %s45
      %s48 = sphi 0, %s47
      %s62 = sphi 0, %s48
      %s68 = sphi 0, %s70
      %s71 = sphi 0, %s68
      %s72 = sphi 0, %s71
      %s88 = sphi 0, %s72
      %s94 = sphi 0, %s96
      %s97 = sphi 0, %s94
      %s98 = sphi 0, %s97
      %s114 = sphi 0, %s98
      %s120 = sphi 0, %s122
      %s123 = sphi 0, %s120
      %s124 = sphi 0, %s123
      %s140 = sphi 0, %s124
    $region4: #{conv_lstm_cell.1} parent=1 // loop_header_branch
      %14 = sbr.rel (%p12) target = $region8
    $region5: #{conv_lstm_cell.1} parent=1 // loop_body
      %s16 = ssub.s32 %s11, 1
      %s17 = ssub.s32 %s11, 2
      %s18 = sadd.s32 %s11, 1
      %s19 = ssub.s32 %s11, %s18
      %p20 = scmp.eq.s32.totalorder %s19, 0
      %s22 = sadd.s32 %s21, 1
      %s23 = scalar_select %p20, %s21, %s22
      %p26 = pneg %p20
      %p27 = scmp.eq.s32.totalorder %s11, 1
      %p28 = por %p26, %p27
      %p29 = scmp.ne.s32.totalorder %s21, %s24
      %p30 = scmp.eq.s32.totalorder %s11, 0
      %p31 = por %p29, %p30
      %p32 = scmp.ne.s32.totalorder %s21, %s24
      %p33 = scmp.eq.s32.totalorder %s16, 1
      %p34 = por %p32, %p33
      %p35 = scmp.ne.s32.totalorder %s24, %s25
      %p36 = scmp.eq.s32.totalorder %s16, 0
      %p37 = por %p35, %p36
      %p38 = scmp.ne.s32.totalorder %s24, %s25
      %p39 = scmp.eq.s32.totalorder %s17, 1
      %p40 = por %p38, %p39
      %p42 = scmp.ne.s32.totalorder %s25, %s41
      %p43 = scmp.eq.s32.totalorder %s17, 0
      %p44 = por %p42, %p43
      %s46 = sadd.s32 %s45, 1
      %p49 = scmp.eq.s32.totalorder %s11, 1
      %p50 = scmp.ne.s32.totalorder %s45, %s47
      %p51 = scmp.eq.s32.totalorder %s11, 0
      %p52 = por %p50, %p51
      %p53 = scmp.ne.s32.totalorder %s45, %s47
      %p54 = scmp.eq.s32.totalorder %s16, 1
      %p55 = por %p53, %p54
      %p56 = scmp.ne.s32.totalorder %s47, %s48
      %p57 = scmp.eq.s32.totalorder %s16, 0
      %p58 = por %p56, %p57
      %p59 = scmp.ne.s32.totalorder %s47, %s48
      %p60 = scmp.eq.s32.totalorder %s17, 1
      %p61 = por %p59, %p60
      %p63 = scmp.ne.s32.totalorder %s48, %s62
      %p64 = scmp.eq.s32.totalorder %s17, 0
      %p65 = por %p63, %p64
      %s66 = ssub.s32 %s11, %s18
      %p67 = scmp.eq.s32.totalorder %s66, 0
      %s69 = sadd.s32 %s68, 1
      %s70 = scalar_select %p67, %s68, %s69
      %p73 = pneg %p67
      %p74 = scmp.eq.s32.totalorder %s11, 1
      %p75 = por %p73, %p74
      %p76 = scmp.ne.s32.totalorder %s68, %s71
      %p77 = scmp.eq.s32.totalorder %s11, 0
      %p78 = por %p76, %p77
      %p79 = scmp.ne.s32.totalorder %s68, %s71
      %p80 = scmp.eq.s32.totalorder %s16, 1
      %p81 = por %p79, %p80
      %p82 = scmp.ne.s32.totalorder %s71, %s72
      %p83 = scmp.eq.s32.totalorder %s16, 0
      %p84 = por %p82, %p83
      %p85 = scmp.ne.s32.totalorder %s71, %s72
      %p86 = scmp.eq.s32.totalorder %s17, 1
      %p87 = por %p85, %p86
      %p89 = scmp.ne.s32.totalorder %s72, %s88
      %p90 = scmp.eq.s32.totalorder %s17, 0
      %p91 = por %p89, %p90
      %s92 = ssub.s32 %s11, %s18
      %p93 = scmp.eq.s32.totalorder %s92, 0
      %s95 = sadd.s32 %s94, 1
      %s96 = scalar_select %p93, %s94, %s95
      %p99 = pneg %p93
      %p100 = scmp.eq.s32.totalorder %s11, 1
      %p101 = por %p99, %p100
      %p102 = scmp.ne.s32.totalorder %s94, %s97
      %p103 = scmp.eq.s32.totalorder %s11, 0
      %p104 = por %p102, %p103
      %p105 = scmp.ne.s32.totalorder %s94, %s97
      %p106 = scmp.eq.s32.totalorder %s16, 1
      %p107 = por %p105, %p106
      %p108 = scmp.ne.s32.totalorder %s97, %s98
      %p109 = scmp.eq.s32.totalorder %s16, 0
      %p110 = por %p108, %p109
      %p111 = scmp.ne.s32.totalorder %s97, %s98
      %p112 = scmp.eq.s32.totalorder %s17, 1
      %p113 = por %p111, %p112
      %p115 = scmp.ne.s32.totalorder %s98, %s114
      %p116 = scmp.eq.s32.totalorder %s17, 0
      %p117 = por %p115, %p116
      %s118 = ssub.s32 %s11, %s18
      %p119 = scmp.eq.s32.totalorder %s118, 0
      %s121 = sadd.s32 %s120, 1
      %s122 = scalar_select %p119, %s120, %s121
      %p125 = pneg %p119
      %p126 = scmp.eq.s32.totalorder %s11, 1
      %p127 = por %p125, %p126
      %p128 = scmp.ne.s32.totalorder %s120, %s123
      %p129 = scmp.eq.s32.totalorder %s11, 0
      %p130 = por %p128, %p129
      %p131 = scmp.ne.s32.totalorder %s120, %s123
      %p132 = scmp.eq.s32.totalorder %s16, 1
      %p133 = por %p131, %p132
      %p134 = scmp.ne.s32.totalorder %s123, %s124
      %p135 = scmp.eq.s32.totalorder %s16, 0
      %p136 = por %p134, %p135
      %p137 = scmp.ne.s32.totalorder %s123, %s124
      %p138 = scmp.eq.s32.totalorder %s17, 1
      %p139 = por %p137, %p138
      %p141 = scmp.ne.s32.totalorder %s124, %s140
      %p142 = scmp.eq.s32.totalorder %s17, 0
      %p143 = por %p141, %p142
      %p144 = scmp.le.s32.totalorder 1, %s11
      %p145 = scmp.lt.s32.totalorder %s11, 3
      %p146 = pnand %p144, %p145
      %p147 = pneg %p146
      // Predicated region
      $region9: #{conv_lstm_cell.1} parent=5 // pred_check
        _
      $region10: #{conv_lstm_cell.1} parent=5 // pred_check_branch
        %149 = sbr.rel (%p146) target = $region12
      $region11: #{conv_lstm_cell.1} parent=5 // pred_region
        %s150 = ssub.s32 %s11, 1
        // Predicated region
        $region13: #{conv_lstm_cell.1} parent=11 // pred_check
          %p151 = pneg %p58
        $region14: #{conv_lstm_cell.1} parent=11 // pred_check_branch
          %153 = sbr.rel (%p151) target = $region16
        $region15: #{conv_lstm_cell.1} parent=11 // pred_region
          _
        $region16: #{conv_lstm_cell.1} parent=11 // pred_fallthru
          _
      $region12: #{conv_lstm_cell.1} parent=5 // pred_fallthru
        _
      %p154 = scmp.lt.s32.totalorder %s11, 2
      // Predicated region
      $region17: #{conv_lstm_cell.1} parent=5 // pred_check
        %p155 = pneg %p154
      $region18: #{conv_lstm_cell.1} parent=5 // pred_check_branch
        %157 = sbr.rel (%p155) target = $region20
      $region19: #{conv_lstm_cell.1} parent=5 // pred_region
        // Predicated region
        $region21: #{conv_lstm_cell.1} parent=19 // pred_check
          %p158 = pneg %p31
        $region22: #{conv_lstm_cell.1} parent=19 // pred_check_branch
          %160 = sbr.rel (%p158) target = $region24
        $region23: #{conv_lstm_cell.1} parent=19 // pred_region
          %s161 = sand.u32 %s21, 1
          %s162 = sand.u32 %s21, 1
          %s163 = smul.addr %s162, 256
          %s164 = scalar_lea.vmem [#allocation2], %s163
          %s165 = smul.u32 2, %s11
          %s166 = smul.addr %s165, 8
          %s167 = scalar_lea.vmem %s0, %s166
          // Predicated region
          $region25: #{conv_lstm_cell.1} parent=23 // pred_check
            _
          $region26: #{conv_lstm_cell.1} parent=23 // pred_check_branch
            %169 = sbr.rel (0) target = $region28
          $region27: #{conv_lstm_cell.1} parent=23 // pred_region
            // Predicated region
            $region29: #{conv_lstm_cell.1} parent=27 // pred_check
              _
            $region30: #{conv_lstm_cell.1} parent=27 // pred_check_branch
              %171 = sbr.rel (0) target = $region32
            $region31: #{conv_lstm_cell.1} parent=27 // pred_region
              loop: start=0, step=1, limit=1
              $region33: #{conv_lstm_cell.1} parent=31 // loop_pre_header
                _
              $region34: #{conv_lstm_cell.1} parent=31 // loop_header
                %s173 = sphi 0, %s177
                %p174 = scmp.ge.s32.totalorder %s173, 1
                %s178 = sphi %s167, %s167
                %s179 = sphi %s164, %s164
              $region35: #{conv_lstm_cell.1} parent=31 // loop_header_branch
                %176 = sbr.rel (%p174) target = $region39
              $region36: #{conv_lstm_cell.1} parent=31 // loop_body
                %v180 = vld [vmem:[%s178] sm:$0xff]
                %181 = vst [vmem:[%s179] sm:$0xff] %v180
                %v182 = vld [vmem:[%s178 + $0x8] sm:$0xff]
                %183 = vst [vmem:[%s179 + $0x8] sm:$0xff] %v182
                %v184 = vld [vmem:[%s178 + $0x20] sm:$0xff]
                %185 = vst [vmem:[%s179 + $0x10] sm:$0xff] %v184
                %v186 = vld [vmem:[%s178 + $0x28] sm:$0xff]
                %187 = vst [vmem:[%s179 + $0x18] sm:$0xff] %v186
                %v188 = vld [vmem:[%s178 + $0x40] sm:$0xff]
                %189 = vst [vmem:[%s179 + $0x20] sm:$0xff] %v188
                %v190 = vld [vmem:[%s178 + $0x48] sm:$0xff]
                %191 = vst [vmem:[%s179 + $0x28] sm:$0xff] %v190
                %v192 = vld [vmem:[%s178 + $0x60] sm:$0xff]
                %193 = vst [vmem:[%s179 + $0x30] sm:$0xff] %v192
                %v194 = vld [vmem:[%s178 + $0x68] sm:$0xff]
                %195 = vst [vmem:[%s179 + $0x38] sm:$0xff] %v194
                %v196 = vld [vmem:[%s178 + $0x80] sm:$0xff]
                %197 = vst [vmem:[%s179 + $0x40] sm:$0xff] %v196
                %v198 = vld [vmem:[%s178 + $0x88] sm:$0xff]
                %199 = vst [vmem:[%s179 + $0x48] sm:$0xff] %v198
                %v200 = vld [vmem:[%s178 + $0xa0] sm:$0xff]
                %201 = vst [vmem:[%s179 + $0x50] sm:$0xff] %v200
                %v202 = vld [vmem:[%s178 + $0xa8] sm:$0xff]
                %203 = vst [vmem:[%s179 + $0x58] sm:$0xff] %v202
                %v204 = vld [vmem:[%s178 + $0xc0] sm:$0xff]
                %205 = vst [vmem:[%s179 + $0x60] sm:$0xff] %v204
                %v206 = vld [vmem:[%s178 + $0xc8] sm:$0xff]
                %207 = vst [vmem:[%s179 + $0x68] sm:$0xff] %v206
                %v208 = vld [vmem:[%s178 + $0xe0] sm:$0xff]
                %209 = vst [vmem:[%s179 + $0x70] sm:$0xff] %v208
                %v210 = vld [vmem:[%s178 + $0xe8] sm:$0xff]
                %211 = vst [vmem:[%s179 + $0x78] sm:$0xff] %v210
                %v212 = vld [vmem:[%s178 + $0x100] sm:$0xff]
                %213 = vst [vmem:[%s179 + $0x80] sm:$0xff] %v212
                %v214 = vld [vmem:[%s178 + $0x108] sm:$0xff]
                %215 = vst [vmem:[%s179 + $0x88] sm:$0xff] %v214
                %v216 = vld [vmem:[%s178 + $0x120] sm:$0xff]
                %217 = vst [vmem:[%s179 + $0x90] sm:$0xff] %v216
                %v218 = vld [vmem:[%s178 + $0x128] sm:$0xff]
                %219 = vst [vmem:[%s179 + $0x98] sm:$0xff] %v218
                %v220 = vld [vmem:[%s178 + $0x140] sm:$0xff]
                %221 = vst [vmem:[%s179 + $0xa0] sm:$0xff] %v220
                %v222 = vld [vmem:[%s178 + $0x148] sm:$0xff]
                %223 = vst [vmem:[%s179 + $0xa8] sm:$0xff] %v222
                %v224 = vld [vmem:[%s178 + $0x160] sm:$0xff]
                %225 = vst [vmem:[%s179 + $0xb0] sm:$0xff] %v224
                %v226 = vld [vmem:[%s178 + $0x168] sm:$0xff]
                %227 = vst [vmem:[%s179 + $0xb8] sm:$0xff] %v226
                %v228 = vld [vmem:[%s178 + $0x180] sm:$0xff]
                %229 = vst [vmem:[%s179 + $0xc0] sm:$0xff] %v228
                %v230 = vld [vmem:[%s178 + $0x188] sm:$0xff]
                %231 = vst [vmem:[%s179 + $0xc8] sm:$0xff] %v230
                %v232 = vld [vmem:[%s178 + $0x1a0] sm:$0xff]
                %233 = vst [vmem:[%s179 + $0xd0] sm:$0xff] %v232
                %v234 = vld [vmem:[%s178 + $0x1a8] sm:$0xff]
                %235 = vst [vmem:[%s179 + $0xd8] sm:$0xff] %v234
                %v236 = vld [vmem:[%s178 + $0x1c0] sm:$0xff]
                %237 = vst [vmem:[%s179 + $0xe0] sm:$0xff] %v236
                %v238 = vld [vmem:[%s178 + $0x1c8] sm:$0xff]
                %239 = vst [vmem:[%s179 + $0xe8] sm:$0xff] %v238
                %v240 = vld [vmem:[%s178 + $0x1e0] sm:$0xff]
                %241 = vst [vmem:[%s179 + $0xf0] sm:$0xff] %v240
                %v242 = vld [vmem:[%s178 + $0x1e8] sm:$0xff]
                %243 = vst [vmem:[%s179 + $0xf8] sm:$0xff] %v242
              $region37: #{conv_lstm_cell.1} parent=31 // loop_footer
                %s177 = sadd.s32 1, %s173
              $region38: #{conv_lstm_cell.1} parent=31 // loop_footer_branch
                %172 = sbr.rel target = $region34
              $region39: #{conv_lstm_cell.1} parent=31 // loop_exit
                _
            $region32: #{conv_lstm_cell.1} parent=27 // pred_fallthru
              _
            // Predicated region
            $region40: #{conv_lstm_cell.1} parent=27 // pred_check
              _
            $region41: #{conv_lstm_cell.1} parent=27 // pred_check_branch
              %245 = sbr.rel target = $region43
            $region42: #{conv_lstm_cell.1} parent=27 // pred_region
              _
            $region43: #{conv_lstm_cell.1} parent=27 // pred_fallthru
              _
          $region28: #{conv_lstm_cell.1} parent=23 // pred_fallthru
            _
          %246 = vnop
        $region24: #{conv_lstm_cell.1} parent=19 // pred_fallthru
          _
        // Predicated region
        $region44: #{conv_lstm_cell.1} parent=19 // pred_check
          %p247 = pneg %p78
        $region45: #{conv_lstm_cell.1} parent=19 // pred_check_branch
          %249 = sbr.rel (%p247) target = $region47
        $region46: #{conv_lstm_cell.1} parent=19 // pred_region
          %s250 = smul.u32 2, %s11
          %p251 = scmp.lt.s32.totalorder %s250, 3
          %s252 = scalar_select %p251, %s250, 3
          %s253 = smul.addr %s252, 8
          %s254 = scalar_lea.vmem %s2, %s253
          %s255 = smul.u32 2, %s11
        $region47: #{conv_lstm_cell.1} parent=19 // pred_fallthru
          _
      $region20: #{conv_lstm_cell.1} parent=5 // pred_fallthru
        _
      %p256 = scmp.le.s32.totalorder 1, %s11
      %p257 = scmp.lt.s32.totalorder %s11, 3
      %p258 = pnand %p256, %p257
      %p259 = pneg %p258
      // Predicated region
      $region48: #{conv_lstm_cell.1} parent=5 // pred_check
        _
      $region49: #{conv_lstm_cell.1} parent=5 // pred_check_branch
        %261 = sbr.rel (%p258) target = $region51
      $region50: #{conv_lstm_cell.1} parent=5 // pred_region
        %s262 = ssub.s32 %s11, 1
        %s263 = sand.u32 %s24, 1
        %s264 = sand.u32 %s24, 1
        %s265 = smul.addr %s264, 256
        %s266 = scalar_lea.vmem [#allocation2], %s265
        // Predicated region
        $region52: #{conv_lstm_cell.1} parent=50 // pred_check
          %p267 = pneg %p37
        $region53: #{conv_lstm_cell.1} parent=50 // pred_check_branch
          %269 = sbr.rel (%p267) target = $region55
        $region54: #{conv_lstm_cell.1} parent=50 // pred_region
          _
        $region55: #{conv_lstm_cell.1} parent=50 // pred_fallthru
          _
        %s270 = sand.u32 %s24, 1
        %s271 = sand.u32 %s24, 1
        %s272 = smul.addr %s271, 256
        %s273 = scalar_lea.vmem [#allocation2], %s272
        %p274 = pneg %p37
        %p275 = pneg %p34
        %p276 = pneg %p58
        %p277 = pneg %p55
        %s278 = smul.u32 2, %s16
        %p279 = scmp.lt.s32.totalorder %s278, 3
        %s280 = scalar_select %p279, %s278, 3
        %s281 = smul.addr %s280, 8
        %s282 = scalar_lea.vmem %s2, %s281
        %p283 = pneg %p84
        %p284 = pneg %p81
        %p285 = pneg %p110
        %p286 = pneg %p107
        %s287 = smul.u32 2, %s16
        %p288 = scmp.lt.s32.totalorder %s287, 3
        %s289 = scalar_select %p288, %s287, 3
        %s290 = smul.addr %s289, 8
        %s291 = scalar_lea.vmem %s3, %s290
        %p292 = pneg %p136
        %p293 = pneg %p133
        %s294 = smul.u32 2, %s16
        %p295 = scmp.lt.s32.totalorder %s294, 3
        %s296 = scalar_select %p295, %s294, 3
        %s297 = smul.addr %s296, 8
        %s298 = scalar_lea.vmem %s4, %s297
        %s299 = smul.u32 2, %s16
        %s300 = smul.u32 2, %s16
        %p301 = scmp.lt.s32.totalorder %s300, 3
        %s302 = scalar_select %p301, %s300, 3
        %s303 = smul.addr %s302, 8
        %s304 = scalar_lea.vmem %s2, %s303
        %s305 = smul.u32 2, %s16
        %s306 = smul.u32 2, %s16
        %p307 = scmp.lt.s32.totalorder %s306, 3
        %s308 = scalar_select %p307, %s306, 3
        %s309 = smul.addr %s308, 8
        %s310 = scalar_lea.vmem %s3, %s309
        %s311 = smul.u32 2, %s16
        %s312 = smul.u32 2, %s16
        %p313 = scmp.lt.s32.totalorder %s312, 3
        %s314 = scalar_select %p313, %s312, 3
        %s315 = smul.addr %s314, 8
        %s316 = scalar_lea.vmem %s4, %s315
        %s317 = smul.u32 2, %s16
        %v318 = vld [vmem:[%s1] sm:$0xff]
        %v319 = vld [vmem:[%s1 + $0x8] sm:$0xff]
        %v320 = vld [vmem:[%s1 + $0x10] sm:$0xff]
        %v321 = vld [vmem:[%s1 + $0x18] sm:$0xff]
        %v322 = vld [vmem:[%s266] sm:$0xff]
        %v323 = vld [vmem:[%s266 + $0x8] sm:$0xff]
        %v324 = vld [vmem:[%s266 + $0x10] sm:$0xff]
        %v325 = vld [vmem:[%s266 + $0x18] sm:$0xff]
        %v326 = vld [vmem:[%s266 + $0x20] sm:$0xff]
        %v327 = vld [vmem:[%s266 + $0x28] sm:$0xff]
        %v328 = vld [vmem:[%s266 + $0x30] sm:$0xff]
        %v329 = vld [vmem:[%s266 + $0x38] sm:$0xff]
        %v330 = vld [vmem:[%s266 + $0x40] sm:$0xff]
        %v331 = vld [vmem:[%s266 + $0x48] sm:$0xff]
        %v332 = vld [vmem:[%s266 + $0x50] sm:$0xff]
        %v333 = vld [vmem:[%s266 + $0x58] sm:$0xff]
        %v334 = vld [vmem:[%s266 + $0x60] sm:$0xff]
        %v335 = vld [vmem:[%s266 + $0x68] sm:$0xff]
        %v336 = vld [vmem:[%s266 + $0x70] sm:$0xff]
        %v337 = vld [vmem:[%s266 + $0x78] sm:$0xff]
        %v338 = vld [vmem:[%s266 + $0x80] sm:$0xff]
        %v339 = vld [vmem:[%s266 + $0x88] sm:$0xff]
        %v340 = vld [vmem:[%s266 + $0x90] sm:$0xff]
        %v341 = vld [vmem:[%s266 + $0x98] sm:$0xff]
        %v342 = vld [vmem:[%s266 + $0xa0] sm:$0xff]
        %v343 = vld [vmem:[%s266 + $0xa8] sm:$0xff]
        %v344 = vld [vmem:[%s266 + $0xb0] sm:$0xff]
        %v345 = vld [vmem:[%s266 + $0xb8] sm:$0xff]
        %v346 = vld [vmem:[%s266 + $0xc0] sm:$0xff]
        %v347 = vld [vmem:[%s266 + $0xc8] sm:$0xff]
        %v348 = vld [vmem:[%s266 + $0xd0] sm:$0xff]
        %v349 = vld [vmem:[%s266 + $0xd8] sm:$0xff]
        %v350 = vld [vmem:[%s266 + $0xe0] sm:$0xff]
        %v351 = vld [vmem:[%s266 + $0xe8] sm:$0xff]
        %v352 = vld [vmem:[%s266 + $0xf0] sm:$0xff]
        %v353 = vld [vmem:[%s266 + $0xf8] sm:$0xff]
        %354 = vmatprep.subr.mxu0 %v353
        %355 = vmatpush1.msra.mxu0 %v352
        %356 = vmatprep.subr.mxu0 %v351
        %357 = vmatpush1.msra.mxu0 %v350
        %358 = vmatprep.subr.mxu0 %v349
        %359 = vmatpush1.msra.mxu0 %v348
        %360 = vmatprep.subr.mxu0 %v347
        %361 = vmatpush1.msra.mxu0 %v346
        %362 = vmatprep.subr.mxu0 %v345
        %363 = vmatpush1.msra.mxu0 %v344
        %364 = vmatprep.subr.mxu0 %v343
        %365 = vmatpush1.msra.mxu0 %v342
        %366 = vmatprep.subr.mxu0 %v341
        %367 = vmatpush1.msra.mxu0 %v340
        %368 = vmatprep.subr.mxu0 %v339
        %369 = vmatpush1.msra.mxu0 %v338
        %370 = vmatprep.subr.mxu0 %v337
        %371 = vmatpush1.msra.mxu0 %v336
        %372 = vmatprep.subr.mxu0 %v335
        %373 = vmatpush1.msra.mxu0 %v334
        %374 = vmatprep.subr.mxu0 %v333
        %375 = vmatpush1.msra.mxu0 %v332
        %376 = vmatprep.subr.mxu0 %v331
        %377 = vmatpush1.msra.mxu0 %v330
        %378 = vmatprep.subr.mxu0 %v329
        %379 = vmatpush1.msra.mxu0 %v328
        %380 = vmatprep.subr.mxu0 %v327
        %381 = vmatpush1.msra.mxu0 %v326
        %382 = vmatprep.subr.mxu0 %v325
        %383 = vmatpush1.msra.mxu0 %v324
        %384 = vmatprep.subr.mxu0 %v323
        %385 = vmatpush1.msra.mxu0 %v322
        %386 = vmatprep.subr.mxu0 0.0
        %387 = vmatpush2.msra.mxu0 0.0
        %388 = vmatprep.subr.mxu0 0.0
        %389 = vmatpush2.msra.mxu0 0.0
        %390 = vmatprep.subr.mxu0 0.0
        %391 = vmatpush2.msra.mxu0 0.0
        %392 = vmatprep.subr.mxu0 0.0
        %393 = vmatpush2.msra.mxu0 0.0
        %394 = vmatprep.subr.mxu0 0.0
        %395 = vmatpush2.msra.mxu0 0.0
        %396 = vmatprep.subr.mxu0 0.0
        %397 = vmatpush2.msra.mxu0 0.0
        %398 = vmatprep.subr.mxu0 0.0
        %399 = vmatpush2.msra.mxu0 0.0
        %400 = vmatprep.subr.mxu0 0.0
        %401 = vmatpush2.msra.mxu0 0.0
        %402 = vmatprep.subr.mxu0 0.0
        %403 = vmatpush2.msra.mxu0 0.0
        %404 = vmatprep.subr.mxu0 0.0
        %405 = vmatpush2.msra.mxu0 0.0
        %406 = vmatprep.subr.mxu0 0.0
        %407 = vmatpush2.msra.mxu0 0.0
        %408 = vmatprep.subr.mxu0 0.0
        %409 = vmatpush2.msra.mxu0 0.0
        %410 = vmatprep.subr.mxu0 0.0
        %411 = vmatpush2.msra.mxu0 0.0
        %412 = vmatprep.subr.mxu0 0.0
        %413 = vmatpush2.msra.mxu0 0.0
        %414 = vmatprep.subr.mxu0 0.0
        %415 = vmatpush2.msra.mxu0 0.0
        %416 = vmatprep.subr.mxu0 0.0
        %417 = vmatpush2.msra.mxu0 0.0
        %418 = vmatprep.mubr.f32.mxu0 0.0
        %419 = vmatmul.mubr.f32.gmra.mxu0 %v318
        %v420 = vpop.f32.mrf.mxu0
        %v421 = vadd.f32 0.0, %v420
        %v422 = vpop.f32.mrf.mxu0
        %v423 = vadd.f32 0.0, %v422
        %424 = vmatprep.mubr.f32.mxu0 0.0
        %425 = vmatmul.mubr.f32.gmra.mxu0 %v319
        %v426 = vpop.f32.mrf.mxu0
        %v427 = vadd.f32 0.0, %v426
        %v428 = vpop.f32.mrf.mxu0
        %v429 = vadd.f32 0.0, %v428
        %430 = vmatprep.mubr.f32.mxu0 0.0
        %431 = vmatmul.mubr.f32.gmra.mxu0 %v320
        %v432 = vpop.f32.mrf.mxu0
        %v433 = vadd.f32 0.0, %v432
        %v434 = vpop.f32.mrf.mxu0
        %v435 = vadd.f32 0.0, %v434
        %436 = vmatprep.mubr.f32.mxu0 0.0
        %437 = vmatmul.mubr.f32.gmra.mxu0 %v321
        %v438 = vpop.f32.mrf.mxu0
        %v439 = vadd.f32 0.0, %v438
        %v440 = vpop.f32.mrf.mxu0
        %v441 = vadd.f32 0.0, %v440
        %442 = vdwg.mxu0
        %v443 = vxor.u32 %v421, 2147483648
        %v444 = vxor.u32 %v423, 2147483648
        %v445 = vmul.f32 %v443, 1.442695
        %v446 = vpow.pop %v445
        %v447 = vmul.f32 %v444, 1.442695
        %v448 = vpow.pop %v447
        %v449 = vadd.f32 %v446, 1.0
        %v450 = vadd.f32 %v448, 1.0
        %v451 = vrcp.pop %v449
        %v452 = vmul.f32 1.0, %v451
        %v453 = vrcp.pop %v450
        %v454 = vmul.f32 1.0, %v453
        %v455 = vxor.u32 %v427, 2147483648
        %v456 = vxor.u32 %v429, 2147483648
        %v457 = vmul.f32 %v455, 1.442695
        %v458 = vpow.pop %v457
        %v459 = vmul.f32 %v456, 1.442695
        %v460 = vpow.pop %v459
        %v461 = vadd.f32 %v458, 1.0
        %v462 = vadd.f32 %v460, 1.0
        %v463 = vrcp.pop %v461
        %v464 = vmul.f32 1.0, %v463
        %v465 = vrcp.pop %v462
        %v466 = vmul.f32 1.0, %v465
        %v467 = vxor.u32 %v433, 2147483648
        %v468 = vxor.u32 %v435, 2147483648
        %v469 = vmul.f32 %v467, 1.442695
        %v470 = vpow.pop %v469
        %v471 = vmul.f32 %v468, 1.442695
        %v472 = vpow.pop %v471
        %v473 = vadd.f32 %v470, 1.0
        %v474 = vadd.f32 %v472, 1.0
        %v475 = vrcp.pop %v473
        %v476 = vmul.f32 1.0, %v475
        %v477 = vrcp.pop %v474
        %v478 = vmul.f32 1.0, %v477
        %v479 = vtanh.pop %v439
        %v480 = vtanh.pop %v441
        %v481 = vld [vmem:[%s304] sm:$0xff]
        %v482 = vld [vmem:[%s304 + $0x8] sm:$0xff]
        %v483 = vmul.f32 %v464, %v481
        %v484 = vmul.f32 %v466, %v482
        %v485 = vmul.f32 %v452, %v479
        %v486 = vmul.f32 %v454, %v480
        %v487 = vadd.f32 %v483, %v485
        %v488 = vadd.f32 %v484, %v486
        %v489 = vtanh.pop %v487
        %v490 = vtanh.pop %v488
        %v491 = vmul.f32 %v476, %v489
        %v492 = vmul.f32 %v478, %v490
        %493 = vst [vmem:[%s310] sm:$0xff] %v491
        %494 = vst [vmem:[%s310 + $0x8] sm:$0xff] %v492
        %495 = vst [vmem:[%s316] sm:$0xff] %v487
        %496 = vst [vmem:[%s316 + $0x8] sm:$0xff] %v488
        %s497 = smul.u32 2, %s16
        %p498 = scmp.lt.s32.totalorder %s497, 3
        %s499 = scalar_select %p498, %s497, 3
        %s500 = smul.addr %s499, 8
        %s501 = scalar_lea.vmem %s3, %s500
        %s502 = smul.u32 2, %s16
        %p503 = scmp.lt.s32.totalorder %s502, 3
        %s504 = scalar_select %p503, %s502, 3
        %s505 = smul.addr %s504, 8
        %s506 = scalar_lea.vmem %s4, %s505
        // Predicated region
        $region56: #{conv_lstm_cell.1} parent=50 // pred_check
          %p507 = pneg %p107
        $region57: #{conv_lstm_cell.1} parent=50 // pred_check_branch
          %509 = sbr.rel (%p507) target = $region59
        $region58: #{conv_lstm_cell.1} parent=50 // pred_region
          %s510 = smul.u32 2, %s16
        $region59: #{conv_lstm_cell.1} parent=50 // pred_fallthru
          _
        // Predicated region
        $region60: #{conv_lstm_cell.1} parent=50 // pred_check
          %p511 = pneg %p133
        $region61: #{conv_lstm_cell.1} parent=50 // pred_check_branch
          %513 = sbr.rel (%p511) target = $region63
        $region62: #{conv_lstm_cell.1} parent=50 // pred_region
          %s514 = smul.u32 2, %s16
        $region63: #{conv_lstm_cell.1} parent=50 // pred_fallthru
          _
      $region51: #{conv_lstm_cell.1} parent=5 // pred_fallthru
        _
      %p515 = scmp.le.s32.totalorder 2, %s11
      // Predicated region
      $region64: #{conv_lstm_cell.1} parent=5 // pred_check
        %p516 = pneg %p515
      $region65: #{conv_lstm_cell.1} parent=5 // pred_check_branch
        %518 = sbr.rel (%p516) target = $region67
      $region66: #{conv_lstm_cell.1} parent=5 // pred_region
        %s519 = ssub.s32 %s11, 2
        // Predicated region
        $region68: #{conv_lstm_cell.1} parent=66 // pred_check
          %p520 = pneg %p113
        $region69: #{conv_lstm_cell.1} parent=66 // pred_check_branch
          %522 = sbr.rel (%p520) target = $region71
        $region70: #{conv_lstm_cell.1} parent=66 // pred_region
          %s523 = smul.u32 2, %s17
          %p524 = scmp.lt.s32.totalorder %s523, 3
          %s525 = scalar_select %p524, %s523, 3
          %s526 = smul.addr %s525, 8
          %s527 = scalar_lea.vmem %s3, %s526
        $region71: #{conv_lstm_cell.1} parent=66 // pred_fallthru
          _
        // Predicated region
        $region72: #{conv_lstm_cell.1} parent=66 // pred_check
          %p528 = pneg %p139
        $region73: #{conv_lstm_cell.1} parent=66 // pred_check_branch
          %530 = sbr.rel (%p528) target = $region75
        $region74: #{conv_lstm_cell.1} parent=66 // pred_region
          %s531 = smul.u32 2, %s17
          %p532 = scmp.lt.s32.totalorder %s531, 3
          %s533 = scalar_select %p532, %s531, 3
          %s534 = smul.addr %s533, 8
          %s535 = scalar_lea.vmem %s4, %s534
        $region75: #{conv_lstm_cell.1} parent=66 // pred_fallthru
          _
      $region67: #{conv_lstm_cell.1} parent=5 // pred_fallthru
        _
    $region6: #{conv_lstm_cell.1} parent=1 // loop_footer
      %s15 = sadd.s32 1, %s11
    $region7: #{conv_lstm_cell.1} parent=1 // loop_footer_branch
      %10 = sbr.rel target = $region3
    $region8: #{conv_lstm_cell.1} parent=1 // loop_exit
      _

</llo_original>
